<compile_context>
chip_gen: v5e
topology: v5e:2x2
jax: 0.10.0
libtpu: 0.0.40
codegen_flags: <defaults>
</compile_context>

<pallas_src>
import functools

import jax
import jax.numpy as jnp
from jax.experimental import pallas as pl
from jax.experimental.pallas import tpu as pltpu

_LANE = 128
_MIB = 1024 * 1024
# Below this element count the fixed pallas_call launch + per-step overhead
# dominates; a fused XLA elementwise op is strictly faster.
_MIN_KERNEL_ELEMS = 1 << 15            # 32768 elems (128 KiB at f32)
# Single-tile arrays at/above this size are split so in/out DMAs pipeline.
_MIN_SPLIT_BYTES = 512 * 1024
_SPLIT_TARGET_BLOCKS = 4


def _relu_kernel(x_ref, o_ref):
    # Elementwise ReLU on the current VMEM tile (single VPU op, HBM-bound).
    o_ref[...] = jnp.maximum(x_ref[...], 0)


@functools.lru_cache(maxsize=1)
def _chip_config():
    """(tile_bytes, vmem_limit_bytes or None), tuned per TPU generation.

    Tile growth and the scoped-VMEM budget move together: resident VMEM is
    ~4x the tile (input + output, each double-buffered).
    """
    kind = ""
    try:
        kind = jax.devices()[0].device_kind.lower()
    except Exception:
        pass
    if "v5" in kind:                      # ~0.82 TB/s HBM, 128 MiB VMEM
        return 4 * _MIB, 32 * _MIB
    if "v6" in kind:                      # ~1.4 TB/s HBM, 128 MiB VMEM
        return 8 * _MIB, 64 * _MIB
    if "v7" in kind or "7x" in kind:      # ~3.2 TB/s HBM, 64 MiB VMEM per TC
        return 6 * _MIB, 48 * _MIB
    # Unknown / older generation: keep the conservative known-good config and
    # leave the scoped-VMEM budget at its default.
    return 2 * _MIB, None


def _pick_block_rows(rows, itemsize, tile_bytes):
    """Pick a sublane-aligned (block_rows, 128) tile of ~tile_bytes."""
    # Sublane packing: 8 rows for 32-bit, 16 for 16-bit, 32 for 8-bit dtypes.
    sublane = max(8, 32 // max(itemsize, 1))
    max_block_rows = max((tile_bytes // (_LANE * itemsize)) // sublane * sublane,
                         sublane)
    if rows > max_block_rows:
        return max_block_rows
    # Whole array fits in one tile.  For mid-size tensors split into a few
    # sublane-aligned blocks anyway: a 1-step grid has zero pipelining
    # (DMA-in -> compute -> DMA-out fully serialized), while 2-4 blocks let
    # writeback of block i-1 overlap the fetch of block i+1.
    if (rows >= _SPLIT_TARGET_BLOCKS * sublane
            and rows * _LANE * itemsize >= _MIN_SPLIT_BYTES):
        block_rows = pl.cdiv(rows, _SPLIT_TARGET_BLOCKS)
        block_rows = pl.cdiv(block_rows, sublane) * sublane
        return block_rows
    # Tiny: single full-extent block (always legal).
    return rows


def _relu_2d(x2d):
    """Pallas ReLU over a lane-dense 2D (rows, 128) array."""
    rows, cols = x2d.shape
    itemsize = x2d.dtype.itemsize
    tile_bytes, vmem_limit = _chip_config()
    block_rows = _pick_block_rows(rows, itemsize, tile_bytes)
    grid = (pl.cdiv(rows, block_rows),)  # ragged last block handled by Pallas
    n = rows * cols

    compiler_kwargs = dict(dimension_semantics=(pltpu.PARALLEL,))
    if vmem_limit is not None:
        compiler_kwargs["vmem_limit_bytes"] = vmem_limit

    return pl.pallas_call(
        _relu_kernel,
        out_shape=jax.ShapeDtypeStruct((rows, cols), x2d.dtype),
        grid=grid,
        in_specs=[pl.BlockSpec((block_rows, cols), lambda i: (i, 0))],
        out_specs=pl.BlockSpec((block_rows, cols), lambda i: (i, 0)),
        compiler_params=pltpu.CompilerParams(**compiler_kwargs),
        cost_estimate=pl.CostEstimate(
            flops=n, transcendentals=0, bytes_accessed=2 * n * itemsize),
    )(x2d)


def pallas_relu(x):
    """ReLU for arbitrary-shaped input; the hot path runs in a Pallas kernel."""
    n = x.size
    # Tiny tensors, or tensors that would need host-side padding copies
    # (element count not a multiple of 128), go through fused XLA elementwise —
    # strictly faster / already at HBM roofline for a pure elementwise op.
    if n < _MIN_KERNEL_ELEMS or n % _LANE != 0:
        return jnp.maximum(x, 0)
    x2d = x.reshape(-1, _LANE)           # free, lane-dense view of flat NCHW
    y2d = _relu_2d(x2d)
    return y2d.reshape(x.shape)


class MonitoredRelu:
    """JAX/Pallas port of the PyTorch MonitoredRelu module."""
    buffer = []
    ids = []
    ordered_buffer = {}

    def __init__(self, monitor: bool = True, use_pallas: bool = True):
        self.monitor = monitor
        # When this ReLU sits between other jitted ops, prefer use_pallas=False
        # so XLA fuses max(x, 0) into the producer epilogue (saves 2N bytes of
        # HBM traffic vs. a standalone kernel).  The Pallas path is for
        # standalone / monitored eager calls.
        self.use_pallas = use_pallas
        if len(MonitoredRelu.ids) == 0:
            self.id = 0
            MonitoredRelu.ids.append(0)
        else:
            self.id = max(MonitoredRelu.ids) + 1
            MonitoredRelu.ids.append(self.id)
        MonitoredRelu.ordered_buffer[self.id] = []

    def forward(self, x):
        if self.monitor:
            # TODO(synk): under jax.jit these are tracers, not concrete arrays
            # (host-side monitoring has no in-graph Pallas equivalent), and in
            # eager mode they pin full device arrays in HBM until reset().
            MonitoredRelu.buffer.append(x)
            MonitoredRelu.ordered_buffer[self.id].append(x)
        if self.use_pallas:
            return pallas_relu(x)
        return jnp.maximum(x, 0)

    def __call__(self, x):
        return self.forward(x)

    @classmethod
    def reset(cls):
        cls.buffer = []
        for module_id in cls.ids:
            cls.ordered_buffer[module_id] = []

    @classmethod
    def reset_ids(cls):
        cls.ids = []
        cls.ordered_buffer = {}


if __name__ == "__main__":
    key = jax.random.PRNGKey(0)
    k0, k1, k2, k3 = jax.random.split(key, 4)

    # 1) Module-level test on the canonical small NCHW input (fast path +
    #    monitor bookkeeping).
    x_small = jax.random.normal(k0, (2, 4, 16, 16), dtype=jnp.float32)
    module = MonitoredRelu(monitor=True)
    y_small = jax.block_until_ready(module(x_small))
    assert y_small.shape == x_small.shape and y_small.dtype == x_small.dtype
    assert jnp.allclose(y_small, jnp.maximum(x_small, 0.0))
    assert len(MonitoredRelu.buffer) == 1
    assert len(MonitoredRelu.ordered_buffer[module.id]) == 1

    # 2) Kernel path, mid-size tensor (fits one tile -> split into ~4 blocks
    #    so DMAs pipeline).
    x_med = jax.random.normal(k1, (4, 16, 64, 64), dtype=jnp.float32)  # 1 MiB
    y_med = jax.block_until_ready(pallas_relu(x_med))
    assert jnp.allclose(y_med, jnp.maximum(x_med, 0.0))

    # 3) Kernel path, multi-block grid with ragged last block.
    x_big = jax.random.normal(k2, (8, 66, 32, 32), dtype=jnp.float32)  # ~2 MiB
    y_big = jax.block_until_ready(pallas_relu(x_big))
    assert jnp.allclose(y_big, jnp.maximum(x_big, 0.0))

    # 4) Kernel path with a packed dtype (bf16 sublane packing).
    x_bf16 = x_med.astype(jnp.bfloat16)
    y_bf16 = jax.block_until_ready(pallas_relu(x_bf16))
    assert y_bf16.dtype == jnp.bfloat16
    assert jnp.allclose(y_bf16.astype(jnp.float32),
                        jnp.maximum(x_bf16, 0).astype(jnp.float32))

    # 5) Non-128-multiple element count -> safe XLA fallback, no padding copies.
    x_odd = jax.random.normal(k3, (3, 5, 7), dtype=jnp.float32)
    y_odd = jax.block_until_ready(pallas_relu(x_odd))
    assert jnp.allclose(y_odd, jnp.maximum(x_odd, 0.0))

    # 6) XLA-fusion path of the module (use_pallas=False).
    module_fused = MonitoredRelu(monitor=False, use_pallas=False)
    y_fused = jax.block_until_ready(module_fused(x_med))
    assert jnp.allclose(y_fused, jnp.maximum(x_med, 0.0))

    print("KERNEL_OK")
</pallas_src>

<mosaic_0001>
module attributes {stable_mosaic.version = 11 : i64} {
  func.func @_relu_kernel(%arg0: i32, %arg1: memref<512x128xf32, #tpu.memory_space<vmem>>, %arg2: memref<512x128xf32, #tpu.memory_space<vmem>>) attributes {dimension_semantics = [#tpu.dimension_semantics<parallel>], iteration_bounds = array<i64: 4>, scalar_prefetch = 0 : i64, scratch_operands = 0 : i64, tpu.core_type = #tpu.core_type<tc>, window_params = [{transform_indices = @transform_0, window_bounds = array<i64: 512, 128>}, {transform_indices = @transform_1, window_bounds = array<i64: 512, 128>}]} {
    %c0 = arith.constant 0 : index
    %c0_0 = arith.constant 0 : index
    %0 = vector.load %arg1[%c0, %c0_0] : memref<512x128xf32, #tpu.memory_space<vmem>>, vector<512x128xf32>
    %cst = arith.constant 0.000000e+00 : f32
    %1 = vector.broadcast %cst : f32 to vector<512x128xf32>
    %2 = arith.maximumf %0, %1 : vector<512x128xf32>
    %c0_1 = arith.constant 0 : index
    %c0_2 = arith.constant 0 : index
    %3 = vector.load %arg2[%c0_1, %c0_2] : memref<512x128xf32, #tpu.memory_space<vmem>>, vector<512x128xf32>
    tpu.vector_store %arg2[%c0_1, %c0_2], %2 {strides = array<i32>} : memref<512x128xf32, #tpu.memory_space<vmem>>, vector<512x128xf32>,
    return
  }
  func.func @transform_0(%arg0: i32) -> (i32, i32) {
    %c0_i32 = arith.constant 0 : i32
    %c0_i32_0 = arith.constant 0 : i32
    return %arg0, %c0_i32 : i32, i32
  }
  func.func @transform_1(%arg0: i32) -> (i32, i32) {
    %c0_i32 = arith.constant 0 : i32
    %c0_i32_0 = arith.constant 0 : i32
    return %arg0, %c0_i32 : i32, i32
  }
}

</mosaic_0001>

<llo_original>
// kernel: tpu_custom_call.1
$region0: #{tpu_custom_call.1}
  #allocation0 [shape = 'u32[]', space=smem, size = 0x4, offset = 0x4, fixed_abs, tag = 'smem constant byte address 0x4 - core index']
  #allocation1 [shape = 'u32[72,128]{1,0:T(1,128)}', space=vmem, size = 0x9000, scoped, tag = 'internal scratch']
  %s0 = inlined_call_operand.hbm [shape: f32[2048,128], index: 0, kind: input, shape index: {}]
  %s1 = inlined_call_operand.hbm [shape: f32[2048,128], index: 1, kind: output, shape index: {}]
  %s2 = sld [smem:[#allocation0]]
  $region41: #{tpu_custom_call.1} parent=0
    _
  %s4 = ssub.s32 1, %s2
  %s5 = scalar_select 0, %s4, %s2
  $region1: #{tpu_custom_call.1} parent=0
    #allocation2 [shape = 'u8[524288]{0}', space=vmem, size = 0x80000, scoped, tag = 'input window, operand 0']
    #allocation3 [shape = 's32[2]{0}', space=sflag, size = 0x8, scoped, tag = 'scoped memory for tpu_custom_call.1']
    #allocation4 [shape = 's32[2]{0}', space=sflag, size = 0x8, scoped, tag = 'scoped memory for tpu_custom_call.1']
    #allocation5 [shape = 'u8[524288]{0}', space=vmem, size = 0x80000, scoped, tag = 'output window, operand 0']
    %6 = vsyncpa [#allocation3], 0
    %s7 = scalar_lea.sflag [#allocation3], 1
    %8 = vsyncpa %s7, 0
    %9 = vsyncpa [#allocation4], 0
    %s10 = scalar_lea.sflag [#allocation4], 1
    %11 = vsyncpa %s10, 0
    loop: start=0, step=1, limit=6
    $region2: #{tpu_custom_call.1} parent=1 // loop_pre_header
      _
    $region3: #{tpu_custom_call.1} parent=1 // loop_header
      %s13 = sphi 0, %s17
      %p14 = scmp.ge.s32.totalorder %s13, 6
      %s23 = sphi 0, %s25
      %s26 = sphi 0, %s23
      %s27 = sphi 0, %s26
      %s43 = sphi 0, %s27
      %s49 = sphi 0, %s51
      %s52 = sphi 0, %s49
      %s53 = sphi 0, %s52
      %s69 = sphi 0, %s53
    $region4: #{tpu_custom_call.1} parent=1 // loop_header_branch
      %16 = sbr.rel (%p14) target = $region8
    $region5: #{tpu_custom_call.1} parent=1 // loop_body
      %s18 = ssub.s32 %s13, 1
      %s19 = ssub.s32 %s13, 2
      %s20 = sadd.s32 %s13, 1
      %s21 = ssub.s32 %s13, %s20
      %p22 = scmp.eq.s32.totalorder %s21, 0
      %s24 = sadd.s32 %s23, 1
      %s25 = scalar_select %p22, %s23, %s24
      %p28 = pneg %p22
      %p29 = scmp.eq.s32.totalorder %s13, 3
      %p30 = por %p28, %p29
      %p31 = scmp.ne.s32.totalorder %s23, %s26
      %p32 = scmp.eq.s32.totalorder %s13, 0
      %p33 = por %p31, %p32
      %p34 = scmp.ne.s32.totalorder %s23, %s26
      %p35 = scmp.eq.s32.totalorder %s18, 3
      %p36 = por %p34, %p35
      %p37 = scmp.ne.s32.totalorder %s26, %s27
      %p38 = scmp.eq.s32.totalorder %s18, 0
      %p39 = por %p37, %p38
      %p40 = scmp.ne.s32.totalorder %s26, %s27
      %p41 = scmp.eq.s32.totalorder %s19, 3
      %p42 = por %p40, %p41
      %p44 = scmp.ne.s32.totalorder %s27, %s43
      %p45 = scmp.eq.s32.totalorder %s19, 0
      %p46 = por %p44, %p45
      %s47 = ssub.s32 %s13, %s20
      %p48 = scmp.eq.s32.totalorder %s47, 0
      %s50 = sadd.s32 %s49, 1
      %s51 = scalar_select %p48, %s49, %s50
      %p54 = pneg %p48
      %p55 = scmp.eq.s32.totalorder %s13, 3
      %p56 = por %p54, %p55
      %p57 = scmp.ne.s32.totalorder %s49, %s52
      %p58 = scmp.eq.s32.totalorder %s13, 0
      %p59 = por %p57, %p58
      %p60 = scmp.ne.s32.totalorder %s49, %s52
      %p61 = scmp.eq.s32.totalorder %s18, 3
      %p62 = por %p60, %p61
      %p63 = scmp.ne.s32.totalorder %s52, %s53
      %p64 = scmp.eq.s32.totalorder %s18, 0
      %p65 = por %p63, %p64
      %p66 = scmp.ne.s32.totalorder %s52, %s53
      %p67 = scmp.eq.s32.totalorder %s19, 3
      %p68 = por %p66, %p67
      %p70 = scmp.ne.s32.totalorder %s53, %s69
      %p71 = scmp.eq.s32.totalorder %s19, 0
      %p72 = por %p70, %p71
      %p73 = scmp.le.s32.totalorder 1, %s13
      %p74 = scmp.lt.s32.totalorder %s13, 5
      %p75 = pnand %p73, %p74
      %p76 = pneg %p75
      // Predicated region
      $region9: #{tpu_custom_call.1} parent=5 // pred_check
        _
      $region10: #{tpu_custom_call.1} parent=5 // pred_check_branch
        %78 = sbr.rel (%p75) target = $region12
      $region11: #{tpu_custom_call.1} parent=5 // pred_region
        %s79 = ssub.s32 %s13, 1
      $region12: #{tpu_custom_call.1} parent=5 // pred_fallthru
        _
      %p80 = scmp.lt.s32.totalorder %s13, 4
      // Predicated region
      $region13: #{tpu_custom_call.1} parent=5 // pred_check
        %p81 = pneg %p80
      $region14: #{tpu_custom_call.1} parent=5 // pred_check_branch
        %83 = sbr.rel (%p81) target = $region16
      $region15: #{tpu_custom_call.1} parent=5 // pred_region
        // Predicated region
        $region17: #{tpu_custom_call.1} parent=15 // pred_check
          %p84 = pneg %p33
        $region18: #{tpu_custom_call.1} parent=15 // pred_check_branch
          %86 = sbr.rel (%p84) target = $region20
        $region19: #{tpu_custom_call.1} parent=15 // pred_region
          %s87 = sand.u32 %s23, 1
          %s88 = scalar_lea.sflag [#allocation3], %s87
          %s89 = sand.u32 %s23, 1
          %s90 = smul.addr %s89, 512
          %s91 = scalar_lea.vmem [#allocation2], %s90
          %s92 = smul.u32 64, %s13
          %94 = vsyncadd %s88, 0
          %s95 = smul.addr %s92, 8
          %s96 = scalar_lea.hbm %s0, %s95
          %s97 = sshll.u32 %s96, 4
          %s98 = int_to_ptr.hbm [resolvable:$true] %s97
          %s99 = sshll.u32 %s91, 4
          %s100 = int_to_ptr.vmem [resolvable:$true] %s99
          %105 = dma.hbm_to_vmem [thread:$0]  %s98, 8192, %s100, %s88, 128, 128, 8
        $region20: #{tpu_custom_call.1} parent=15 // pred_fallthru
          _
      $region16: #{tpu_custom_call.1} parent=5 // pred_fallthru
        _
      %p106 = scmp.le.s32.totalorder 1, %s13
      %p107 = scmp.lt.s32.totalorder %s13, 5
      %p108 = pnand %p106, %p107
      %p109 = pneg %p108
      // Predicated region
      $region21: #{tpu_custom_call.1} parent=5 // pred_check
        _
      $region22: #{tpu_custom_call.1} parent=5 // pred_check_branch
        %111 = sbr.rel (%p108) target = $region24
      $region23: #{tpu_custom_call.1} parent=5 // pred_region
        %s112 = ssub.s32 %s13, 1
        %s113 = sand.u32 %s26, 1
        %s114 = scalar_lea.sflag [#allocation3], %s113
        %s115 = sand.u32 %s26, 1
        %s116 = smul.addr %s115, 512
        %s117 = scalar_lea.vmem [#allocation2], %s116
        // Predicated region
        $region25: #{tpu_custom_call.1} parent=23 // pred_check
          %p118 = pneg %p39
        $region26: #{tpu_custom_call.1} parent=23 // pred_check_branch
          %120 = sbr.rel (%p118) target = $region28
        $region27: #{tpu_custom_call.1} parent=23 // pred_region
          %122 = dma.done %s114, 8192
        $region28: #{tpu_custom_call.1} parent=23 // pred_fallthru
          _
        %s123 = sand.u32 %s26, 1
        %s124 = scalar_lea.sflag [#allocation3], %s123
        %s125 = sand.u32 %s26, 1
        %s126 = smul.addr %s125, 512
        %s127 = scalar_lea.vmem [#allocation2], %s126
        %p128 = pneg %p39
        %p129 = pneg %p36
        %p130 = pneg %p65
        %p131 = pneg %p62
        %s132 = sand.u32 %s52, 1
        %s133 = scalar_lea.sflag [#allocation4], %s132
        %s134 = sand.u32 %s52, 1
        %s135 = smul.addr %s134, 512
        %s136 = scalar_lea.vmem [#allocation5], %s135
        %s137 = smul.u32 64, %s18
        %s138 = smul.u32 64, %s18
        %v139 = vld [vmem:[%s117] sm:$0xff]
        %v140 = vld [vmem:[%s117 + $0x8] sm:$0xff]
        %v141 = vld [vmem:[%s117 + $0x10] sm:$0xff]
        %v142 = vld [vmem:[%s117 + $0x18] sm:$0xff]
        %v143 = vld [vmem:[%s117 + $0x20] sm:$0xff]
        %v144 = vld [vmem:[%s117 + $0x28] sm:$0xff]
        %v145 = vld [vmem:[%s117 + $0x30] sm:$0xff]
        %v146 = vld [vmem:[%s117 + $0x38] sm:$0xff]
        %v147 = vld [vmem:[%s117 + $0x40] sm:$0xff]
        %v148 = vld [vmem:[%s117 + $0x48] sm:$0xff]
        %v149 = vld [vmem:[%s117 + $0x50] sm:$0xff]
        %v150 = vld [vmem:[%s117 + $0x58] sm:$0xff]
        %v151 = vld [vmem:[%s117 + $0x60] sm:$0xff]
        %v152 = vld [vmem:[%s117 + $0x68] sm:$0xff]
        %v153 = vld [vmem:[%s117 + $0x70] sm:$0xff]
        %v154 = vld [vmem:[%s117 + $0x78] sm:$0xff]
        %v155 = vld [vmem:[%s117 + $0x80] sm:$0xff]
        %v156 = vld [vmem:[%s117 + $0x88] sm:$0xff]
        %v157 = vld [vmem:[%s117 + $0x90] sm:$0xff]
        %v158 = vld [vmem:[%s117 + $0x98] sm:$0xff]
        %v159 = vld [vmem:[%s117 + $0xa0] sm:$0xff]
        %v160 = vld [vmem:[%s117 + $0xa8] sm:$0xff]
        %v161 = vld [vmem:[%s117 + $0xb0] sm:$0xff]
        %v162 = vld [vmem:[%s117 + $0xb8] sm:$0xff]
        %v163 = vld [vmem:[%s117 + $0xc0] sm:$0xff]
        %v164 = vld [vmem:[%s117 + $0xc8] sm:$0xff]
        %v165 = vld [vmem:[%s117 + $0xd0] sm:$0xff]
        %v166 = vld [vmem:[%s117 + $0xd8] sm:$0xff]
        %v167 = vld [vmem:[%s117 + $0xe0] sm:$0xff]
        %v168 = vld [vmem:[%s117 + $0xe8] sm:$0xff]
        %v169 = vld [vmem:[%s117 + $0xf0] sm:$0xff]
        %v170 = vld [vmem:[%s117 + $0xf8] sm:$0xff]
        %v171 = vld [vmem:[%s117 + $0x100] sm:$0xff]
        %v172 = vld [vmem:[%s117 + $0x108] sm:$0xff]
        %v173 = vld [vmem:[%s117 + $0x110] sm:$0xff]
        %v174 = vld [vmem:[%s117 + $0x118] sm:$0xff]
        %v175 = vld [vmem:[%s117 + $0x120] sm:$0xff]
        %v176 = vld [vmem:[%s117 + $0x128] sm:$0xff]
        %v177 = vld [vmem:[%s117 + $0x130] sm:$0xff]
        %v178 = vld [vmem:[%s117 + $0x138] sm:$0xff]
        %v179 = vld [vmem:[%s117 + $0x140] sm:$0xff]
        %v180 = vld [vmem:[%s117 + $0x148] sm:$0xff]
        %v181 = vld [vmem:[%s117 + $0x150] sm:$0xff]
        %v182 = vld [vmem:[%s117 + $0x158] sm:$0xff]
        %v183 = vld [vmem:[%s117 + $0x160] sm:$0xff]
        %v184 = vld [vmem:[%s117 + $0x168] sm:$0xff]
        %v185 = vld [vmem:[%s117 + $0x170] sm:$0xff]
        %v186 = vld [vmem:[%s117 + $0x178] sm:$0xff]
        %v187 = vld [vmem:[%s117 + $0x180] sm:$0xff]
        %v188 = vld [vmem:[%s117 + $0x188] sm:$0xff]
        %v189 = vld [vmem:[%s117 + $0x190] sm:$0xff]
        %v190 = vld [vmem:[%s117 + $0x198] sm:$0xff]
        %v191 = vld [vmem:[%s117 + $0x1a0] sm:$0xff]
        %v192 = vld [vmem:[%s117 + $0x1a8] sm:$0xff]
        %v193 = vld [vmem:[%s117 + $0x1b0] sm:$0xff]
        %v194 = vld [vmem:[%s117 + $0x1b8] sm:$0xff]
        %v195 = vld [vmem:[%s117 + $0x1c0] sm:$0xff]
        %v196 = vld [vmem:[%s117 + $0x1c8] sm:$0xff]
        %v197 = vld [vmem:[%s117 + $0x1d0] sm:$0xff]
        %v198 = vld [vmem:[%s117 + $0x1d8] sm:$0xff]
        %v199 = vld [vmem:[%s117 + $0x1e0] sm:$0xff]
        %v200 = vld [vmem:[%s117 + $0x1e8] sm:$0xff]
        %v201 = vld [vmem:[%s117 + $0x1f0] sm:$0xff]
        %v202 = vld [vmem:[%s117 + $0x1f8] sm:$0xff]
        %v203 = vmax.f32 %v139, 0.0
        %v204 = vmax.f32 %v140, 0.0
        %v205 = vmax.f32 %v141, 0.0
        %v206 = vmax.f32 %v142, 0.0
        %v207 = vmax.f32 %v143, 0.0
        %v208 = vmax.f32 %v144, 0.0
        %v209 = vmax.f32 %v145, 0.0
        %v210 = vmax.f32 %v146, 0.0
        %v211 = vmax.f32 %v147, 0.0
        %v212 = vmax.f32 %v148, 0.0
        %v213 = vmax.f32 %v149, 0.0
        %v214 = vmax.f32 %v150, 0.0
        %v215 = vmax.f32 %v151, 0.0
        %v216 = vmax.f32 %v152, 0.0
        %v217 = vmax.f32 %v153, 0.0
        %v218 = vmax.f32 %v154, 0.0
        %v219 = vmax.f32 %v155, 0.0
        %v220 = vmax.f32 %v156, 0.0
        %v221 = vmax.f32 %v157, 0.0
        %v222 = vmax.f32 %v158, 0.0
        %v223 = vmax.f32 %v159, 0.0
        %v224 = vmax.f32 %v160, 0.0
        %v225 = vmax.f32 %v161, 0.0
        %v226 = vmax.f32 %v162, 0.0
        %v227 = vmax.f32 %v163, 0.0
        %v228 = vmax.f32 %v164, 0.0
        %v229 = vmax.f32 %v165, 0.0
        %v230 = vmax.f32 %v166, 0.0
        %v231 = vmax.f32 %v167, 0.0
        %v232 = vmax.f32 %v168, 0.0
        %v233 = vmax.f32 %v169, 0.0
        %v234 = vmax.f32 %v170, 0.0
        %v235 = vmax.f32 %v171, 0.0
        %v236 = vmax.f32 %v172, 0.0
        %v237 = vmax.f32 %v173, 0.0
        %v238 = vmax.f32 %v174, 0.0
        %v239 = vmax.f32 %v175, 0.0
        %v240 = vmax.f32 %v176, 0.0
        %v241 = vmax.f32 %v177, 0.0
        %v242 = vmax.f32 %v178, 0.0
        %v243 = vmax.f32 %v179, 0.0
        %v244 = vmax.f32 %v180, 0.0
        %v245 = vmax.f32 %v181, 0.0
        %v246 = vmax.f32 %v182, 0.0
        %v247 = vmax.f32 %v183, 0.0
        %v248 = vmax.f32 %v184, 0.0
        %v249 = vmax.f32 %v185, 0.0
        %v250 = vmax.f32 %v186, 0.0
        %v251 = vmax.f32 %v187, 0.0
        %v252 = vmax.f32 %v188, 0.0
        %v253 = vmax.f32 %v189, 0.0
        %v254 = vmax.f32 %v190, 0.0
        %v255 = vmax.f32 %v191, 0.0
        %v256 = vmax.f32 %v192, 0.0
        %v257 = vmax.f32 %v193, 0.0
        %v258 = vmax.f32 %v194, 0.0
        %v259 = vmax.f32 %v195, 0.0
        %v260 = vmax.f32 %v196, 0.0
        %v261 = vmax.f32 %v197, 0.0
        %v262 = vmax.f32 %v198, 0.0
        %v263 = vmax.f32 %v199, 0.0
        %v264 = vmax.f32 %v200, 0.0
        %v265 = vmax.f32 %v201, 0.0
        %v266 = vmax.f32 %v202, 0.0
        %267 = vst [vmem:[%s136] sm:$0xff] %v203
        %268 = vst [vmem:[%s136 + $0x8] sm:$0xff] %v204
        %269 = vst [vmem:[%s136 + $0x10] sm:$0xff] %v205
        %270 = vst [vmem:[%s136 + $0x18] sm:$0xff] %v206
        %271 = vst [vmem:[%s136 + $0x20] sm:$0xff] %v207
        %272 = vst [vmem:[%s136 + $0x28] sm:$0xff] %v208
        %273 = vst [vmem:[%s136 + $0x30] sm:$0xff] %v209
        %274 = vst [vmem:[%s136 + $0x38] sm:$0xff] %v210
        %275 = vst [vmem:[%s136 + $0x40] sm:$0xff] %v211
        %276 = vst [vmem:[%s136 + $0x48] sm:$0xff] %v212
        %277 = vst [vmem:[%s136 + $0x50] sm:$0xff] %v213
        %278 = vst [vmem:[%s136 + $0x58] sm:$0xff] %v214
        %279 = vst [vmem:[%s136 + $0x60] sm:$0xff] %v215
        %280 = vst [vmem:[%s136 + $0x68] sm:$0xff] %v216
        %281 = vst [vmem:[%s136 + $0x70] sm:$0xff] %v217
        %282 = vst [vmem:[%s136 + $0x78] sm:$0xff] %v218
        %283 = vst [vmem:[%s136 + $0x80] sm:$0xff] %v219
        %284 = vst [vmem:[%s136 + $0x88] sm:$0xff] %v220
        %285 = vst [vmem:[%s136 + $0x90] sm:$0xff] %v221
        %286 = vst [vmem:[%s136 + $0x98] sm:$0xff] %v222
        %287 = vst [vmem:[%s136 + $0xa0] sm:$0xff] %v223
        %288 = vst [vmem:[%s136 + $0xa8] sm:$0xff] %v224
        %289 = vst [vmem:[%s136 + $0xb0] sm:$0xff] %v225
        %290 = vst [vmem:[%s136 + $0xb8] sm:$0xff] %v226
        %291 = vst [vmem:[%s136 + $0xc0] sm:$0xff] %v227
        %292 = vst [vmem:[%s136 + $0xc8] sm:$0xff] %v228
        %293 = vst [vmem:[%s136 + $0xd0] sm:$0xff] %v229
        %294 = vst [vmem:[%s136 + $0xd8] sm:$0xff] %v230
        %295 = vst [vmem:[%s136 + $0xe0] sm:$0xff] %v231
        %296 = vst [vmem:[%s136 + $0xe8] sm:$0xff] %v232
        %297 = vst [vmem:[%s136 + $0xf0] sm:$0xff] %v233
        %298 = vst [vmem:[%s136 + $0xf8] sm:$0xff] %v234
        %299 = vst [vmem:[%s136 + $0x100] sm:$0xff] %v235
        %300 = vst [vmem:[%s136 + $0x108] sm:$0xff] %v236
        %301 = vst [vmem:[%s136 + $0x110] sm:$0xff] %v237
        %302 = vst [vmem:[%s136 + $0x118] sm:$0xff] %v238
        %303 = vst [vmem:[%s136 + $0x120] sm:$0xff] %v239
        %304 = vst [vmem:[%s136 + $0x128] sm:$0xff] %v240
        %305 = vst [vmem:[%s136 + $0x130] sm:$0xff] %v241
        %306 = vst [vmem:[%s136 + $0x138] sm:$0xff] %v242
        %307 = vst [vmem:[%s136 + $0x140] sm:$0xff] %v243
        %308 = vst [vmem:[%s136 + $0x148] sm:$0xff] %v244
        %309 = vst [vmem:[%s136 + $0x150] sm:$0xff] %v245
        %310 = vst [vmem:[%s136 + $0x158] sm:$0xff] %v246
        %311 = vst [vmem:[%s136 + $0x160] sm:$0xff] %v247
        %312 = vst [vmem:[%s136 + $0x168] sm:$0xff] %v248
        %313 = vst [vmem:[%s136 + $0x170] sm:$0xff] %v249
        %314 = vst [vmem:[%s136 + $0x178] sm:$0xff] %v250
        %315 = vst [vmem:[%s136 + $0x180] sm:$0xff] %v251
        %316 = vst [vmem:[%s136 + $0x188] sm:$0xff] %v252
        %317 = vst [vmem:[%s136 + $0x190] sm:$0xff] %v253
        %318 = vst [vmem:[%s136 + $0x198] sm:$0xff] %v254
        %319 = vst [vmem:[%s136 + $0x1a0] sm:$0xff] %v255
        %320 = vst [vmem:[%s136 + $0x1a8] sm:$0xff] %v256
        %321 = vst [vmem:[%s136 + $0x1b0] sm:$0xff] %v257
        %322 = vst [vmem:[%s136 + $0x1b8] sm:$0xff] %v258
        %323 = vst [vmem:[%s136 + $0x1c0] sm:$0xff] %v259
        %324 = vst [vmem:[%s136 + $0x1c8] sm:$0xff] %v260
        %325 = vst [vmem:[%s136 + $0x1d0] sm:$0xff] %v261
        %326 = vst [vmem:[%s136 + $0x1d8] sm:$0xff] %v262
        %327 = vst [vmem:[%s136 + $0x1e0] sm:$0xff] %v263
        %328 = vst [vmem:[%s136 + $0x1e8] sm:$0xff] %v264
        %329 = vst [vmem:[%s136 + $0x1f0] sm:$0xff] %v265
        %330 = vst [vmem:[%s136 + $0x1f8] sm:$0xff] %v266
        %s331 = sand.u32 %s52, 1
        %s332 = scalar_lea.sflag [#allocation4], %s331
        %s333 = sand.u32 %s52, 1
        %s334 = smul.addr %s333, 512
        %s335 = scalar_lea.vmem [#allocation5], %s334
        // Predicated region
        $region29: #{tpu_custom_call.1} parent=23 // pred_check
          %p336 = pneg %p62
        $region30: #{tpu_custom_call.1} parent=23 // pred_check_branch
          %338 = sbr.rel (%p336) target = $region32
        $region31: #{tpu_custom_call.1} parent=23 // pred_region
          %s339 = smul.u32 64, %s18
          %341 = vsyncadd %s332, 0
          %s342 = smul.addr %s339, 8
          %s343 = scalar_lea.hbm %s1, %s342
          %s344 = sshll.u32 %s335, 4
          %s345 = int_to_ptr.vmem [resolvable:$true] %s344
          %s346 = sshll.u32 %s343, 4
          %s347 = int_to_ptr.hbm [resolvable:$true] %s346
          %352 = dma.vmem_to_hbm [thread:$0]  %s345, 8192, %s347, %s332, 128, 128, 8
        $region32: #{tpu_custom_call.1} parent=23 // pred_fallthru
          _
      $region24: #{tpu_custom_call.1} parent=5 // pred_fallthru
        _
      %p353 = scmp.le.s32.totalorder 2, %s13
      // Predicated region
      $region33: #{tpu_custom_call.1} parent=5 // pred_check
        %p354 = pneg %p353
      $region34: #{tpu_custom_call.1} parent=5 // pred_check_branch
        %356 = sbr.rel (%p354) target = $region36
      $region35: #{tpu_custom_call.1} parent=5 // pred_region
        %s357 = ssub.s32 %s13, 2
        // Predicated region
        $region37: #{tpu_custom_call.1} parent=35 // pred_check
          %p358 = pneg %p68
        $region38: #{tpu_custom_call.1} parent=35 // pred_check_branch
          %360 = sbr.rel (%p358) target = $region40
        $region39: #{tpu_custom_call.1} parent=35 // pred_region
          %s361 = sand.u32 %s53, 1
          %s362 = scalar_lea.sflag [#allocation4], %s361
          %s363 = sand.u32 %s53, 1
          %s364 = smul.addr %s363, 512
          %s365 = scalar_lea.vmem [#allocation5], %s364
          %367 = dma.done %s362, 8192
        $region40: #{tpu_custom_call.1} parent=35 // pred_fallthru
          _
      $region36: #{tpu_custom_call.1} parent=5 // pred_fallthru
        _
    $region6: #{tpu_custom_call.1} parent=1 // loop_footer
      %s17 = sadd.s32 1, %s13
    $region7: #{tpu_custom_call.1} parent=1 // loop_footer_branch
      %12 = sbr.rel target = $region3
    $region8: #{tpu_custom_call.1} parent=1 // loop_exit
      _
    %368 = vsyncpa [#allocation3], 1
    %s369 = scalar_lea.sflag [#allocation3], 1
    %370 = vsyncpa %s369, 1
    %371 = vsyncpa [#allocation4], 1
    %s372 = scalar_lea.sflag [#allocation4], 1
    %373 = vsyncpa %s372, 1

</llo_original>
